<compile_context>
chip_gen: v7x
topology: tpu7x:2x2x1
jax: 0.10.0
libtpu: 0.0.40
codegen_flags: <defaults>
</compile_context>

<pallas_src>
import functools

import jax
import jax.numpy as jnp
from jax.experimental import pallas as pl
from jax.experimental.pallas import tpu as pltpu


_VMEM_LIMIT_BYTES = 40 * 1024 * 1024     # <= physical VMEM on v5e/v6e (128 MiB) and v7x (64 MiB)
_LINEAR_VMEM_BUDGET = 20 * 1024 * 1024   # tile-sizing budget incl. double-buffering
_FUSED_LN_MAX_K = 4096                   # fuse LN into the matmul while a full row fits one K tile


# ----------------------------------------------------------------------------
# helpers
# ----------------------------------------------------------------------------
def _pick_tile(dim, quantum, max_target):
    """Largest tile <= max_target that is a multiple of `quantum` and divides dim.
    If none exists, take the smallest divisor above max_target (still a multiple of
    quantum), falling back to the full dim (block == full array dim is always legal)."""
    if dim <= max_target:
        return dim
    if dim % quantum != 0:
        return dim
    t = (max_target // quantum) * quantum
    while t >= quantum:
        if dim % t == 0:
            return t
        t -= quantum
    t = ((max_target // quantum) + 1) * quantum
    while t < dim:
        if dim % t == 0:
            return t
        t += quantum
    return dim


def _gelu_f32(x):
    # tanh-approximation GELU (jax.nn.gelu approximate=True formula).
    c = 0.7978845608028654  # sqrt(2/pi)
    return 0.5 * x * (1.0 + jnp.tanh(c * (x + 0.044715 * x * x * x)))


# ----------------------------------------------------------------------------
# Standalone LayerNorm kernel (fallback only, when D too large to fuse)
# ----------------------------------------------------------------------------
def _layernorm_kernel(x_ref, g_ref, b_ref, o_ref, *, eps):
    x = x_ref[...].astype(jnp.float32)                    # (tm, D)
    mu = jnp.mean(x, axis=-1, keepdims=True)
    xc = x - mu
    var = jnp.mean(xc * xc, axis=-1, keepdims=True)
    inv = jax.lax.rsqrt(var + eps)
    y = xc * inv * g_ref[...].astype(jnp.float32) + b_ref[...].astype(jnp.float32)
    o_ref[...] = y.astype(o_ref.dtype)


def layernorm(x, gamma, beta, *, eps=1e-5):
    M, D = x.shape
    tm = _pick_tile(M, 8, 1024)   # LN is pure HBM-bound: big row tiles
    return pl.pallas_call(
        functools.partial(_layernorm_kernel, eps=eps),
        out_shape=jax.ShapeDtypeStruct((M, D), x.dtype),
        grid_spec=pltpu.PrefetchScalarGridSpec(
            num_scalar_prefetch=0,
            grid=(M // tm,),
            in_specs=[
                pl.BlockSpec((tm, D), lambda i: (i, 0)),
                pl.BlockSpec((1, D), lambda i: (0, 0)),
                pl.BlockSpec((1, D), lambda i: (0, 0)),
            ],
            out_specs=pl.BlockSpec((tm, D), lambda i: (i, 0)),
        ),
        compiler_params=pltpu.CompilerParams(
            dimension_semantics=("parallel",),
            vmem_limit_bytes=_VMEM_LIMIT_BYTES,
        ),
    )(x, gamma, beta)


# ----------------------------------------------------------------------------
# Tiled matmul kernel with fused (optional) LayerNorm / bias / GELU / residual
# ----------------------------------------------------------------------------
def _linear_kernel(*refs, has_ln, has_bias, has_residual, activation, eps,
                   compute_dtype):
    idx = 0
    x_ref = refs[idx]; idx += 1
    if has_ln:
        g_ref = refs[idx]; bln_ref = refs[idx + 1]; idx += 2
    w_ref = refs[idx]; idx += 1
    b_ref = refs[idx] if has_bias else None; idx += int(has_bias)
    r_ref = refs[idx] if has_residual else None; idx += int(has_residual)
    o_ref = refs[idx]
    acc_ref = refs[idx + 1]

    kk = pl.program_id(2)

    @pl.when(kk == 0)
    def _():
        acc_ref[...] = jnp.zeros_like(acc_ref)

    x = x_ref[...].astype(jnp.float32)                     # (tm, tk)
    if has_ln:
        # Fused pre-norm: requires the full hidden row in this K tile (K grid == 1).
        mu = jnp.mean(x, axis=-1, keepdims=True)
        xc = x - mu
        var = jnp.mean(xc * xc, axis=-1, keepdims=True)
        x = (xc * jax.lax.rsqrt(var + eps)
             * g_ref[...].astype(jnp.float32)
             + bln_ref[...].astype(jnp.float32))

    acc_ref[...] += jnp.dot(
        x.astype(compute_dtype),
        w_ref[...].astype(compute_dtype),
        preferred_element_type=jnp.float32,
    )

    @pl.when(kk == pl.num_programs(2) - 1)
    def _():
        out = acc_ref[...]
        if has_bias:
            out = out + b_ref[...].astype(jnp.float32)
        if activation == "gelu":
            out = _gelu_f32(out)
        if has_residual:
            out = out + r_ref[...].astype(jnp.float32)
        o_ref[...] = out.astype(o_ref.dtype)


def linear(x, w, bias=None, residual=None, activation=None,
           ln_gamma=None, ln_beta=None, ln_eps=1e-5,
           *, compute_dtype=jnp.float32,
           tm_max=512, tn_max=512, tk_max=1024):
    """out = act(LN?(x) @ w + bias) + residual   (LN / bias / act / residual optional)."""
    M, K = x.shape
    K2, N = w.shape
    assert K == K2

    # Fallback: hidden dim too large for a single fused K tile -> standalone LN pass.
    if ln_gamma is not None and K > _FUSED_LN_MAX_K:
        x = layernorm(x, ln_gamma, ln_beta, eps=ln_eps)
        ln_gamma = ln_beta = None

    has_ln = ln_gamma is not None
    has_bias = bias is not None
    has_res = residual is not None
    itemsize = jnp.dtype(x.dtype).itemsize

    def pick(tm_t, tn_t, tk_t):
        tm = _pick_tile(M, 8, tm_t)
        tn = _pick_tile(N, 128, tn_t)
        tk = K if has_ln else _pick_tile(K, 128, tk_t)
        return tm, tn, tk

    def vmem_est(tm, tn, tk):
        b = 2 * (tm * tk + tk * tn + tm * tn) * itemsize   # double-buffered x, w, out
        if has_bias:
            b += 2 * tn * itemsize
        if has_res:
            b += 2 * tm * tn * itemsize
        if has_ln:
            b += 4 * K * itemsize
        b += tm * tn * 4                                   # f32 accumulator scratch
        return b

    tm, tn, tk = pick(tm_max, tn_max, tk_max)
    while vmem_est(tm, tn, tk) > _LINEAR_VMEM_BUDGET and (
            tm_max > 8 or tn_max > 128 or tk_max > 128):
        tm_max = max(8, tm_max // 2)
        tn_max = max(128, tn_max // 2)
        if not has_ln:
            tk_max = max(128, tk_max // 2)
        tm, tn, tk = pick(tm_max, tn_max, tk_max)

    in_specs = [pl.BlockSpec((tm, tk), lambda i, j, k: (i, k))]
    args = [x]
    if has_ln:
        in_specs.append(pl.BlockSpec((1, tk), lambda i, j, k: (0, k)))
        in_specs.append(pl.BlockSpec((1, tk), lambda i, j, k: (0, k)))
        args.extend([ln_gamma, ln_beta])
    in_specs.append(pl.BlockSpec((tk, tn), lambda i, j, k: (k, j)))
    args.append(w)
    if has_bias:
        in_specs.append(pl.BlockSpec((1, tn), lambda i, j, k: (0, j)))
        args.append(bias)
    if has_res:
        in_specs.append(pl.BlockSpec((tm, tn), lambda i, j, k: (i, j)))
        args.append(residual)

    bytes_accessed = (M * K + K * N + M * N) * itemsize
    if has_bias:
        bytes_accessed += N * itemsize
    if has_res:
        bytes_accessed += M * N * itemsize
    if has_ln:
        bytes_accessed += 2 * K * itemsize

    return pl.pallas_call(
        functools.partial(
            _linear_kernel,
            has_ln=has_ln,
            has_bias=has_bias,
            has_residual=has_res,
            activation=activation,
            eps=ln_eps,
            compute_dtype=compute_dtype,
        ),
        out_shape=jax.ShapeDtypeStruct((M, N), x.dtype),
        grid_spec=pltpu.PrefetchScalarGridSpec(
            num_scalar_prefetch=0,
            grid=(M // tm, N // tn, K // tk),
            in_specs=in_specs,
            out_specs=pl.BlockSpec((tm, tn), lambda i, j, k: (i, j)),
            scratch_shapes=[pltpu.VMEM((tm, tn), jnp.float32)],
        ),
        compiler_params=pltpu.CompilerParams(
            dimension_semantics=("parallel", "parallel", "arbitrary"),
            vmem_limit_bytes=_VMEM_LIMIT_BYTES,
        ),
        cost_estimate=pl.CostEstimate(
            flops=2 * M * N * K,
            transcendentals=(M * N if activation == "gelu" else 0),
            bytes_accessed=bytes_accessed,
        ),
    )(*args)


# ----------------------------------------------------------------------------
# Flash-style attention: grid (B, S//tq, S//tkv), online softmax, head split via
# BlockSpec index maps on the (B, N, 3, heads, Dh) qkv tensor.
# ----------------------------------------------------------------------------
def _flash_attention_kernel(q_ref, k_ref, v_ref, o_ref, m_sc, l_sc, acc_sc,
                            *, heads, scale, compute_dtype):
    ki = pl.program_id(2)

    @pl.when(ki == 0)
    def _():
        m_sc[...] = jnp.full(m_sc.shape, -jnp.inf, dtype=jnp.float32)
        l_sc[...] = jnp.zeros(l_sc.shape, dtype=jnp.float32)
        acc_sc[...] = jnp.zeros(acc_sc.shape, dtype=jnp.float32)

    q_all = q_ref[...]   # (tq,  heads, Dh)
    k_all = k_ref[...]   # (tkv, heads, Dh)
    v_all = v_ref[...]   # (tkv, heads, Dh)

    # Static per-head loop (heads is a small compile-time constant); keeps all MXU
    # calls as plain 2-D dots and all stores as simple strided slices.
    for h in range(heads):
        # Fold scale into q: O(tq*Dh) multiply instead of scaling the O(tq*tkv) scores.
        qh = q_all[:, h, :].astype(jnp.float32) * scale    # (tq, Dh)
        kh = k_all[:, h, :].astype(jnp.float32)            # (tkv, Dh)
        vh = v_all[:, h, :].astype(jnp.float32)            # (tkv, Dh)

        s = jax.lax.dot_general(
            qh.astype(compute_dtype), kh.astype(compute_dtype),
            (((1,), (1,)), ((), ())),
            preferred_element_type=jnp.float32,
        )                                                  # (tq, tkv)

        m_prev = m_sc[h]                                   # (tq, 1)
        m_new = jnp.maximum(m_prev, jnp.max(s, axis=-1, keepdims=True))
        alpha = jnp.exp(m_prev - m_new)
        p = jnp.exp(s - m_new)
        l_sc[h] = alpha * l_sc[h] + jnp.sum(p, axis=-1, keepdims=True)
        acc_sc[h] = alpha * acc_sc[h] + jnp.dot(
            p.astype(compute_dtype), vh.astype(compute_dtype),
            preferred_element_type=jnp.float32,
        )
        m_sc[h] = m_new

    @pl.when(ki == pl.num_programs(2) - 1)
    def _():
        for h in range(heads):
            inv_l = pl.reciprocal(l_sc[h], approx=True)
            o_ref[:, h, :] = (acc_sc[h] * inv_l).astype(o_ref.dtype)


def attention_core(qkv, *, heads, dim_head, scale, compute_dtype=jnp.float32,
                   tq_max=256, tkv_max=512):
    """qkv: (B, N, 3, heads, Dh) -> context (B, N, heads, Dh)."""
    B, N, three, H, Dh = qkv.shape
    assert three == 3 and H == heads and Dh == dim_head

    tq = _pick_tile(N, 8, tq_max)
    tkv = _pick_tile(N, 8, tkv_max)

    q_spec = pl.BlockSpec((None, tq, None, heads, Dh),
                          lambda b, qi, ki: (b, qi, 0, 0, 0))
    k_spec = pl.BlockSpec((None, tkv, None, heads, Dh),
                          lambda b, qi, ki: (b, ki, 1, 0, 0))
    v_spec = pl.BlockSpec((None, tkv, None, heads, Dh),
                          lambda b, qi, ki: (b, ki, 2, 0, 0))
    o_spec = pl.BlockSpec((None, tq, heads, Dh),
                          lambda b, qi, ki: (b, qi, 0, 0))

    itemsize = jnp.dtype(qkv.dtype).itemsize
    flops = 4 * B * heads * N * N * Dh
    bytes_accessed = 4 * B * N * heads * Dh * itemsize

    return pl.pallas_call(
        functools.partial(
            _flash_attention_kernel,
            heads=heads, scale=scale, compute_dtype=compute_dtype,
        ),
        out_shape=jax.ShapeDtypeStruct((B, N, heads, Dh), qkv.dtype),
        grid_spec=pltpu.PrefetchScalarGridSpec(
            num_scalar_prefetch=0,
            grid=(B, N // tq, N // tkv),
            in_specs=[q_spec, k_spec, v_spec],
            out_specs=o_spec,
            scratch_shapes=[
                pltpu.VMEM((heads, tq, 1), jnp.float32),    # running max m
                pltpu.VMEM((heads, tq, 1), jnp.float32),    # running denom l
                pltpu.VMEM((heads, tq, Dh), jnp.float32),   # running context acc
            ],
        ),
        compiler_params=pltpu.CompilerParams(
            dimension_semantics=("parallel", "parallel", "arbitrary"),
            vmem_limit_bytes=_VMEM_LIMIT_BYTES,
        ),
        cost_estimate=pl.CostEstimate(
            flops=flops,
            transcendentals=B * heads * N * N,
            bytes_accessed=bytes_accessed,
        ),
    )(qkv, qkv, qkv)


# ----------------------------------------------------------------------------
# Full TransformerEncoder forward (Pallas kernels + free wrapper reshapes only)
# ----------------------------------------------------------------------------
def transformer_encoder(x, params, *, heads, dim_head, scale, mask=None,
                        compute_dtype=jnp.float32):
    assert mask is None  # TODO(synk): mask path not implemented
    B, N, D = x.shape
    M = B * N
    inner = heads * dim_head
    xf = x.reshape(M, D)

    for p in params:
        # ---- Residual(PreNorm(Attention)): LN fused into the QKV projection ----
        qkv = linear(xf, p["w_qkv"], ln_gamma=p["g1"], ln_beta=p["be1"],
                     compute_dtype=compute_dtype)                    # (M, 3*inner)
        qkv5 = qkv.reshape(B, N, 3, heads, dim_head)                 # free reshape, no transpose
        ao = attention_core(qkv5, heads=heads, dim_head=dim_head,
                            scale=scale, compute_dtype=compute_dtype)  # (B, N, heads, Dh)
        ao = ao.reshape(M, inner)                                    # free reshape, no transpose
        xf = linear(ao, p["w_out"], bias=p["b_out"], residual=xf,
                    compute_dtype=compute_dtype)

        # ---- Residual(PreNorm(FeedForward)): LN fused into FF1 ----
        f1 = linear(xf, p["w1"], bias=p["b1"], activation="gelu",
                    ln_gamma=p["g2"], ln_beta=p["be2"],
                    compute_dtype=compute_dtype)
        xf = linear(f1, p["w2"], bias=p["b2"], residual=xf,
                    compute_dtype=compute_dtype)

    return xf.reshape(B, N, D)


# ----------------------------------------------------------------------------
# Pure-JAX reference (same math) for correctness checking
# ----------------------------------------------------------------------------
def reference_forward(x, params, *, heads, dim_head, scale):
    B, N, D = x.shape
    inner = heads * dim_head

    def ln(t, g, b):
        mu = jnp.mean(t, axis=-1, keepdims=True)
        var = jnp.mean((t - mu) ** 2, axis=-1, keepdims=True)
        return (t - mu) * jax.lax.rsqrt(var + 1e-5) * g + b

    out = x
    for p in params:
        h = ln(out, p["g1"], p["be1"])
        qkv = (h @ p["w_qkv"]).reshape(B, N, 3, heads, dim_head)
        q = qkv[:, :, 0].transpose(0, 2, 1, 3)
        k = qkv[:, :, 1].transpose(0, 2, 1, 3)
        v = qkv[:, :, 2].transpose(0, 2, 1, 3)
        dots = jnp.einsum("bhid,bhjd->bhij", q, k) * scale
        attn = jax.nn.softmax(dots, axis=-1)
        ao = jnp.einsum("bhij,bhjd->bhid", attn, v)
        ao = ao.transpose(0, 2, 1, 3).reshape(B, N, inner)
        out = ao @ p["w_out"] + p["b_out"] + out
        h2 = ln(out, p["g2"], p["be2"])
        f1 = _gelu_f32(h2 @ p["w1"] + p["b1"])
        out = f1 @ p["w2"] + p["b2"] + out
    return out


# ----------------------------------------------------------------------------
# Demo
# ----------------------------------------------------------------------------
if __name__ == "__main__":
    B, N, dim = 2, 8, 32
    heads, dim_head = 4, 8
    mlp_dim = 64
    depth = 2
    inner = heads * dim_head
    scale = dim ** (-0.5)          # matches the PyTorch module (dim, not dim_head)

    key = jax.random.PRNGKey(0)
    keys = jax.random.split(key, 1 + depth * 10)
    x = jax.random.normal(keys[0], (B, N, dim), dtype=jnp.float32)

    params = []
    ki = 1
    for _ in range(depth):
        layer = {
            "g1": 1.0 + 0.1 * jax.random.normal(keys[ki + 0], (1, dim), jnp.float32),
            "be1": 0.1 * jax.random.normal(keys[ki + 1], (1, dim), jnp.float32),
            "w_qkv": 0.05 * jax.random.normal(keys[ki + 2], (dim, 3 * inner), jnp.float32),
            "w_out": 0.05 * jax.random.normal(keys[ki + 3], (inner, dim), jnp.float32),
            "b_out": 0.05 * jax.random.normal(keys[ki + 4], (1, dim), jnp.float32),
            "g2": 1.0 + 0.1 * jax.random.normal(keys[ki + 5], (1, dim), jnp.float32),
            "be2": 0.1 * jax.random.normal(keys[ki + 6], (1, dim), jnp.float32),
            "w1": 0.05 * jax.random.normal(keys[ki + 7], (dim, mlp_dim), jnp.float32),
            "b1": 0.05 * jax.random.normal(keys[ki + 8], (1, mlp_dim), jnp.float32),
            "w2": 0.05 * jax.random.normal(keys[ki + 9], (mlp_dim, dim), jnp.float32),
            "b2": jnp.zeros((1, dim), jnp.float32),
        }
        params.append(layer)
        ki += 10

    out = transformer_encoder(x, params, heads=heads, dim_head=dim_head, scale=scale)
    jax.block_until_ready(out)

    ref = reference_forward(x, params, heads=heads, dim_head=dim_head, scale=scale)
    assert out.shape == (B, N, dim)
    # Tolerance accounts for the EUP approx reciprocal in the softmax epilogue.
    assert jnp.allclose(out, ref, atol=2e-3, rtol=2e-3), (
        float(jnp.max(jnp.abs(out - ref)))
    )

    print("KERNEL_OK")
</pallas_src>

<mosaic_0001>
module attributes {stable_mosaic.version = 11 : i64} {
  func.func @_linear_kernel(%arg0: i32, %arg1: i32, %arg2: i32, %arg3: memref<16x32xf32, #tpu.memory_space<vmem>>, %arg4: memref<1x32xf32, #tpu.memory_space<vmem>>, %arg5: memref<1x32xf32, #tpu.memory_space<vmem>>, %arg6: memref<32x96xf32, #tpu.memory_space<vmem>>, %arg7: memref<16x96xf32, #tpu.memory_space<vmem>>, %arg8: memref<16x96xf32, #tpu.memory_space<vmem>>) attributes {dimension_semantics = [#tpu.dimension_semantics<parallel>, #tpu.dimension_semantics<parallel>, #tpu.dimension_semantics<arbitrary>], iteration_bounds = array<i64: 1, 1, 1>, scalar_prefetch = 0 : i64, scratch_operands = 1 : i64, tpu.core_type = #tpu.core_type<tc>, window_params = [{transform_indices = @transform_0, window_bounds = array<i64: 16, 32>}, {transform_indices = @transform_1, window_bounds = array<i64: 1, 32>}, {transform_indices = @transform_2, window_bounds = array<i64: 1, 32>}, {transform_indices = @transform_3, window_bounds = array<i64: 32, 96>}, {transform_indices = @transform_4, window_bounds = array<i64: 16, 96>}]} {
    %c0_i32 = arith.constant 0 : i32
    %0 = arith.cmpi eq, %arg2, %c0_i32 : i32
    %1 = arith.extui %0 : i1 to i32
    %c0_i32_0 = arith.constant 0 : i32
    %2 = arith.cmpi ne, %1, %c0_i32_0 : i32
    scf.if %2 {
      %cst_19 = arith.constant 0.000000e+00 : f32
      %34 = vector.broadcast %cst_19 : f32 to vector<16x96xf32>
      %c0_20 = arith.constant 0 : index
      %c0_21 = arith.constant 0 : index
      %35 = vector.load %arg8[%c0_20, %c0_21] : memref<16x96xf32, #tpu.memory_space<vmem>>, vector<16x96xf32>
      tpu.vector_store %arg8[%c0_20, %c0_21], %34 {strides = array<i32>} : memref<16x96xf32, #tpu.memory_space<vmem>>, vector<16x96xf32>,
    } else {
    }
    %c0 = arith.constant 0 : index
    %c0_1 = arith.constant 0 : index
    %3 = vector.load %arg3[%c0, %c0_1] : memref<16x32xf32, #tpu.memory_space<vmem>>, vector<16x32xf32>
    %cst = arith.constant dense<0.000000e+00> : vector<16xf32>
    %4 = vector.multi_reduction <add>, %3, %cst [1] : vector<16x32xf32> to vector<16xf32>
    %5 = vector.shape_cast %4 : vector<16xf32> to vector<16x1xf32>
    %cst_2 = arith.constant 3.200000e+01 : f32
    %6 = vector.broadcast %cst_2 : f32 to vector<16x1xf32>
    %7 = arith.divf %5, %6 : vector<16x1xf32>
    %8 = vector.broadcast %7 : vector<16x1xf32> to vector<16x32xf32>
    %9 = arith.subf %3, %8 : vector<16x32xf32>
    %10 = arith.mulf %9, %9 : vector<16x32xf32>
    %cst_3 = arith.constant dense<0.000000e+00> : vector<16xf32>
    %11 = vector.multi_reduction <add>, %10, %cst_3 [1] : vector<16x32xf32> to vector<16xf32>
    %12 = vector.shape_cast %11 : vector<16xf32> to vector<16x1xf32>
    %cst_4 = arith.constant 3.200000e+01 : f32
    %13 = vector.broadcast %cst_4 : f32 to vector<16x1xf32>
    %14 = arith.divf %12, %13 : vector<16x1xf32>
    %cst_5 = arith.constant 9.99999974E-6 : f32
    %15 = vector.broadcast %cst_5 : f32 to vector<16x1xf32>
    %16 = arith.addf %14, %15 : vector<16x1xf32>
    %17 = math.rsqrt %16 : vector<16x1xf32>
    %18 = vector.broadcast %17 : vector<16x1xf32> to vector<16x32xf32>
    %19 = arith.mulf %9, %18 : vector<16x32xf32>
    %c0_6 = arith.constant 0 : index
    %c0_7 = arith.constant 0 : index
    %20 = vector.load %arg4[%c0_6, %c0_7] : memref<1x32xf32, #tpu.memory_space<vmem>>, vector<1x32xf32>
    %21 = vector.broadcast %20 : vector<1x32xf32> to vector<16x32xf32>
    %22 = arith.mulf %19, %21 : vector<16x32xf32>
    %c0_8 = arith.constant 0 : index
    %c0_9 = arith.constant 0 : index
    %23 = vector.load %arg5[%c0_8, %c0_9] : memref<1x32xf32, #tpu.memory_space<vmem>>, vector<1x32xf32>
    %24 = vector.broadcast %23 : vector<1x32xf32> to vector<16x32xf32>
    %25 = arith.addf %22, %24 : vector<16x32xf32>
    %c0_10 = arith.constant 0 : index
    %c0_11 = arith.constant 0 : index
    %26 = vector.load %arg8[%c0_10, %c0_11] : memref<16x96xf32, #tpu.memory_space<vmem>>, vector<16x96xf32>
    %c0_12 = arith.constant 0 : index
    %c0_13 = arith.constant 0 : index
    %27 = vector.load %arg6[%c0_12, %c0_13] : memref<32x96xf32, #tpu.memory_space<vmem>>, vector<32x96xf32>
    %cst_14 = arith.constant dense<0.000000e+00> : vector<16x96xf32>
    %28 = tpu.matmul %25, %27, %cst_14 {dimension_numbers = #tpu.dot_dimension_numbers<[1], [0], [0], [1], [0, 0, 1, 1], [], []>} : vector<16x32xf32>, vector<32x96xf32>, vector<16x96xf32> -> vector<16x96xf32>
    %29 = arith.addf %26, %28 : vector<16x96xf32>
    %c0_15 = arith.constant 0 : index
    %c0_16 = arith.constant 0 : index
    %30 = vector.load %arg8[%c0_15, %c0_16] : memref<16x96xf32, #tpu.memory_space<vmem>>, vector<16x96xf32>
    tpu.vector_store %arg8[%c0_15, %c0_16], %29 {strides = array<i32>} : memref<16x96xf32, #tpu.memory_space<vmem>>, vector<16x96xf32>,
    %c0_i32_17 = arith.constant 0 : i32
    %31 = arith.cmpi eq, %arg2, %c0_i32_17 : i32
    %32 = arith.extui %31 : i1 to i32
    %c0_i32_18 = arith.constant 0 : i32
    %33 = arith.cmpi ne, %32, %c0_i32_18 : i32
    scf.if %33 {
      %c0_19 = arith.constant 0 : index
      %c0_20 = arith.constant 0 : index
      %34 = vector.load %arg8[%c0_19, %c0_20] : memref<16x96xf32, #tpu.memory_space<vmem>>, vector<16x96xf32>
      %c0_21 = arith.constant 0 : index
      %c0_22 = arith.constant 0 : index
      %35 = vector.load %arg7[%c0_21, %c0_22] : memref<16x96xf32, #tpu.memory_space<vmem>>, vector<16x96xf32>
      tpu.vector_store %arg7[%c0_21, %c0_22], %34 {strides = array<i32>} : memref<16x96xf32, #tpu.memory_space<vmem>>, vector<16x96xf32>,
    } else {
    }
    return
  }
  func.func @transform_0(%arg0: i32, %arg1: i32, %arg2: i32) -> (i32, i32) {
    %c0_i32 = arith.constant 0 : i32
    return %arg0, %arg2 : i32, i32
  }
  func.func @transform_1(%arg0: i32, %arg1: i32, %arg2: i32) -> (i32, i32) {
    %c0_i32 = arith.constant 0 : i32
    %c0_i32_0 = arith.constant 0 : i32
    return %c0_i32, %arg2 : i32, i32
  }
  func.func @transform_2(%arg0: i32, %arg1: i32, %arg2: i32) -> (i32, i32) {
    %c0_i32 = arith.constant 0 : i32
    %c0_i32_0 = arith.constant 0 : i32
    return %c0_i32, %arg2 : i32, i32
  }
  func.func @transform_3(%arg0: i32, %arg1: i32, %arg2: i32) -> (i32, i32) {
    %c0_i32 = arith.constant 0 : i32
    return %arg2, %arg1 : i32, i32
  }
  func.func @transform_4(%arg0: i32, %arg1: i32, %arg2: i32) -> (i32, i32) {
    %c0_i32 = arith.constant 0 : i32
    return %arg0, %arg1 : i32, i32
  }
}

</mosaic_0001>

<llo_original>
// kernel: tpu_custom_call.1
$region0: #{tpu_custom_call.1}
  #allocation0 [shape = 'u32[]', space=smem, size = 0x4, offset = 0x4, fixed_abs, tag = 'smem constant byte address 0x4 - core index']
  #allocation1 [shape = 'u32[144,128]{1,0:T(1,128)}', space=vmem, size = 0x12000, scoped, tag = 'internal scratch']
  #allocation2 [shape = 'f32[16,96]{1,0:T(8,128)}', space=vmem, size = 0x2000, scoped, tag = 'scratch operand']
  %s0 = inlined_call_operand.hbm [shape: f32[16,32], index: 0, kind: input, shape index: {}]
  %s1 = inlined_call_operand.vmem [shape: f32[1,32], index: 1, kind: input, shape index: {}]
  %s2 = inlined_call_operand.vmem [shape: f32[1,32], index: 2, kind: input, shape index: {}]
  %s3 = inlined_call_operand.hbm [shape: f32[32,96], index: 3, kind: input, shape index: {}]
  %s4 = inlined_call_operand.hbm [shape: f32[16,96], index: 4, kind: output, shape index: {}]
  %s5 = sld [smem:[#allocation0]]
  $region42: #{tpu_custom_call.1} parent=0
    _
  %s7 = ssub.s32 1, %s5
  %s8 = scalar_select 0, %s7, %s5
  $region1: #{tpu_custom_call.1} parent=0
    #allocation3 [shape = 'u8[8192]{0}', space=vmem, size = 0x2000, scoped, tag = 'input window, operand 0, single buffered']
    #allocation4 [shape = 's32[1]{0}', space=sflag, size = 0x4, scoped, tag = 'scoped memory for tpu_custom_call.1']
    #allocation5 [shape = 's32[1]{0}', space=sflag, size = 0x4, scoped, tag = 'scoped memory for tpu_custom_call.1']
    #allocation6 [shape = 'u8[16384]{0}', space=vmem, size = 0x4000, scoped, tag = 'input window, operand 3, single buffered']
    #allocation7 [shape = 's32[1]{0}', space=sflag, size = 0x4, scoped, tag = 'scoped memory for tpu_custom_call.1']
    #allocation8 [shape = 'u8[8192]{0}', space=vmem, size = 0x2000, scoped, tag = 'output window, operand 0, single buffered']
    %9 = vsyncpa [#allocation4], 0
    %10 = vsyncpa [#allocation7], 0
    %11 = vsyncpa [#allocation5], 0
    // Predicated region
    $region2: #{tpu_custom_call.1} parent=1 // pred_check
      _
    $region3: #{tpu_custom_call.1} parent=1 // pred_check_branch
      %13 = sbr.rel (0) target = $region5
    $region4: #{tpu_custom_call.1} parent=1 // pred_region
      %s15 = ssub.s32 256, 256
      %16 = vsyncadd [#allocation4], %s15
      %s17 = sshll.u32 [#allocation3], 4
      %s18 = int_to_ptr.vmem [resolvable:$true] %s17
      %23 = dma.hbm_to_vmem [thread:$0]  %s0, 256, %s18, [#allocation4], 128, 128, 8
    $region5: #{tpu_custom_call.1} parent=1 // pred_fallthru
      _
    // Predicated region
    $region6: #{tpu_custom_call.1} parent=1 // pred_check
      _
    $region7: #{tpu_custom_call.1} parent=1 // pred_check_branch
      %25 = sbr.rel (0) target = $region9
    $region8: #{tpu_custom_call.1} parent=1 // pred_region
      _
    $region9: #{tpu_custom_call.1} parent=1 // pred_fallthru
      _
    // Predicated region
    $region10: #{tpu_custom_call.1} parent=1 // pred_check
      _
    $region11: #{tpu_custom_call.1} parent=1 // pred_check_branch
      %27 = sbr.rel (0) target = $region13
    $region12: #{tpu_custom_call.1} parent=1 // pred_region
      _
    $region13: #{tpu_custom_call.1} parent=1 // pred_fallthru
      _
    // Predicated region
    $region14: #{tpu_custom_call.1} parent=1 // pred_check
      _
    $region15: #{tpu_custom_call.1} parent=1 // pred_check_branch
      %29 = sbr.rel (0) target = $region17
    $region16: #{tpu_custom_call.1} parent=1 // pred_region
      %s31 = ssub.s32 512, 512
      %32 = vsyncadd [#allocation7], %s31
      %s33 = sshll.u32 [#allocation6], 4
      %s34 = int_to_ptr.vmem [resolvable:$true] %s33
      %39 = dma.hbm_to_vmem [thread:$0]  %s3, 512, %s34, [#allocation7], 128, 128, 8
    $region17: #{tpu_custom_call.1} parent=1 // pred_fallthru
      _
    // Predicated region
    $region18: #{tpu_custom_call.1} parent=1 // pred_check
      _
    $region19: #{tpu_custom_call.1} parent=1 // pred_check_branch
      %41 = sbr.rel (0) target = $region21
    $region20: #{tpu_custom_call.1} parent=1 // pred_region
      %42 = dma.done [#allocation4], 256
    $region21: #{tpu_custom_call.1} parent=1 // pred_fallthru
      _
    // Predicated region
    $region22: #{tpu_custom_call.1} parent=1 // pred_check
      _
    $region23: #{tpu_custom_call.1} parent=1 // pred_check_branch
      %44 = sbr.rel (0) target = $region25
    $region24: #{tpu_custom_call.1} parent=1 // pred_region
      %45 = dma.done [#allocation7], 512
    $region25: #{tpu_custom_call.1} parent=1 // pred_fallthru
      _
    %p46 = scmp.eq.s32.totalorder 0, 0
    // Predicated region
    $region26: #{tpu_custom_call.1} parent=1 // pred_check
      %p47 = pneg %p46
    $region27: #{tpu_custom_call.1} parent=1 // pred_check_branch
      %49 = sbr.rel (%p47) target = $region29
    $region28: #{tpu_custom_call.1} parent=1 // pred_region
      %vm50 = vcmask 785408
      %51 = vst.msk [vmem:[#allocation2] sm:$0xff] %vm50, 0.0
      %52 = vst.msk [vmem:[#allocation2 + $0x8] sm:$0xff] %vm50, 0.0
    $region29: #{tpu_custom_call.1} parent=1 // pred_fallthru
      _
    %v53 = vld [vmem:[#allocation3] sm:$0xff]
    %v54 = vld [vmem:[#allocation3 + $0x8] sm:$0xff]
    %vm55 = vcmask 261120
    %v56 = vsel %vm55, %v53, 0.0
    %57 = vadd.xlane.f32.xlu0 %v56
    %v58 = vpop.xlane.xlu0 %57
    %v59 = vsel %vm55, %v54, 0.0
    %60 = vadd.xlane.f32.xlu0 %v59
    %v61 = vpop.xlane.xlu0 %60
    %v62 = vrcp.pop 32.0
    %v63 = vmul.f32 %v58, %v62
    %v64 = vmul.f32 %v61, %v62
    %v65 = vsub.f32 %v53, %v63
    %v66 = vsub.f32 %v54, %v64
    %v67 = vmul.f32 %v65, %v65
    %v68 = vmul.f32 %v66, %v66
    %v69 = vsel %vm55, %v67, 0.0
    %70 = vadd.xlane.f32.xlu0 %v69
    %v71 = vpop.xlane.xlu0 %70
    %v72 = vsel %vm55, %v68, 0.0
    %73 = vadd.xlane.f32.xlu0 %v72
    %v74 = vpop.xlane.xlu0 %73
    %v75 = vmul.f32 %v71, %v62
    %v76 = vmul.f32 %v74, %v62
    %v77 = vadd.f32 %v75, 1e-05
    %v78 = vadd.f32 %v76, 1e-05
    %v79 = vrsqrt.pop %v77
    %v80 = vrsqrt.pop %v78
    %v81 = vmul.f32 %v65, %v79
    %v82 = vmul.f32 %v66, %v80
    %v83 = vld [vmem:[%s1] sm:$0x1]
    %v85 = vlaneseq
    %v86 = vshrl.u32 %v85, 7
    %v87 = vsub.s32 0, %v86
    %v88 = vrot.slane %v83, %v87
    %v90 = vmul.f32 %v81, %v88
    %v91 = vmul.f32 %v82, %v88
    %v92 = vld [vmem:[%s2] sm:$0x1]
    %v94 = vlaneseq
    %v95 = vshrl.u32 %v94, 7
    %v96 = vsub.s32 0, %v95
    %v97 = vrot.slane %v92, %v96
    %v99 = vadd.f32 %v90, %v97
    %v100 = vadd.f32 %v91, %v97
    %v101 = vld [vmem:[#allocation2] sm:$0xff]
    %v102 = vld [vmem:[#allocation2 + $0x8] sm:$0xff]
    %v103 = vld [vmem:[#allocation6] sm:$0xff]
    %v104 = vld [vmem:[#allocation6 + $0x8] sm:$0xff]
    %v105 = vld [vmem:[#allocation6 + $0x10] sm:$0xff]
    %v106 = vld [vmem:[#allocation6 + $0x18] sm:$0xff]
    %v108 = vsel %vm55, %v99, 0
    %v111 = vsel %vm55, %v100, 0
    %113 = vmatprep.subr.mxu0 0.0
    %114 = vmatpush1.msra.mxu0 %v103
    %115 = vmatprep.subr.mxu0 0.0
    %116 = vmatpush1.msra.mxu0 %v104
    %117 = vmatprep.subr.mxu0 0.0
    %118 = vmatpush1.msra.mxu0 %v105
    %119 = vmatprep.subr.mxu0 0.0
    %120 = vmatpush1.msra.mxu0 %v106
    %121 = vmatprep.subr.mxu0 0.0
    %122 = vmatpush1.msra.mxu0 0.0
    %123 = vmatprep.subr.mxu0 0.0
    %124 = vmatpush1.msra.mxu0 0.0
    %125 = vmatprep.subr.mxu0 0.0
    %126 = vmatpush1.msra.mxu0 0.0
    %127 = vmatprep.subr.mxu0 0.0
    %128 = vmatpush1.msra.mxu0 0.0
    %129 = vmatprep.subr.mxu0 0.0
    %130 = vmatpush1.msra.mxu0 0.0
    %131 = vmatprep.subr.mxu0 0.0
    %132 = vmatpush1.msra.mxu0 0.0
    %133 = vmatprep.subr.mxu0 0.0
    %134 = vmatpush1.msra.mxu0 0.0
    %135 = vmatprep.subr.mxu0 0.0
    %136 = vmatpush1.msra.mxu0 0.0
    %137 = vmatprep.subr.mxu0 0.0
    %138 = vmatpush1.msra.mxu0 0.0
    %139 = vmatprep.subr.mxu0 0.0
    %140 = vmatpush1.msra.mxu0 0.0
    %141 = vmatprep.subr.mxu0 0.0
    %142 = vmatpush1.msra.mxu0 0.0
    %143 = vmatprep.subr.mxu0 0.0
    %144 = vmatpush1.msra.mxu0 0.0
    %145 = vmatprep.subr.mxu0 0.0
    %146 = vmatpush1.msra.mxu0 0.0
    %147 = vmatprep.subr.mxu0 0.0
    %148 = vmatpush1.msra.mxu0 0.0
    %149 = vmatprep.subr.mxu0 0.0
    %150 = vmatpush1.msra.mxu0 0.0
    %151 = vmatprep.subr.mxu0 0.0
    %152 = vmatpush1.msra.mxu0 0.0
    %153 = vmatprep.subr.mxu0 0.0
    %154 = vmatpush1.msra.mxu0 0.0
    %155 = vmatprep.subr.mxu0 0.0
    %156 = vmatpush1.msra.mxu0 0.0
    %157 = vmatprep.subr.mxu0 0.0
    %158 = vmatpush1.msra.mxu0 0.0
    %159 = vmatprep.subr.mxu0 0.0
    %160 = vmatpush1.msra.mxu0 0.0
    %161 = vmatprep.subr.mxu0 0.0
    %162 = vmatpush1.msra.mxu0 0.0
    %163 = vmatprep.subr.mxu0 0.0
    %164 = vmatpush1.msra.mxu0 0.0
    %165 = vmatprep.subr.mxu0 0.0
    %166 = vmatpush1.msra.mxu0 0.0
    %167 = vmatprep.subr.mxu0 0.0
    %168 = vmatpush1.msra.mxu0 0.0
    %169 = vmatprep.subr.mxu0 0.0
    %170 = vmatpush1.msra.mxu0 0.0
    %171 = vmatprep.subr.mxu0 0.0
    %172 = vmatpush1.msra.mxu0 0.0
    %173 = vmatprep.subr.mxu0 0.0
    %174 = vmatpush1.msra.mxu0 0.0
    %175 = vmatprep.subr.mxu0 0.0
    %176 = vmatpush1.msra.mxu0 0.0
    %177 = vmatprep.mubr.f32.mxu0 0.0
    %178 = vmatmul.mubr.f32.gmra.mrb[0].mxu0 %v108
    %v179 = vpop.f32.mrb[0].mxu0
    %v180 = vadd.f32 0.0, %v179
    %v181 = vpop.f32.mrb[0].mxu0
    %182 = vmatprep.mubr.f32.mxu0 0.0
    %183 = vmatmul.mubr.f32.gmra.mrb[0].mxu0 %v111
    %v184 = vpop.f32.mrb[0].mxu0
    %v185 = vadd.f32 0.0, %v184
    %v186 = vpop.f32.mrb[0].mxu0
    %187 = vdwg.mxu0
    %v188 = vadd.f32 %v101, %v180
    %v189 = vadd.f32 %v102, %v185
    %vm190 = vcmask 785408
    %191 = vst.msk [vmem:[#allocation2] sm:$0xff] %vm190, %v188
    %192 = vst.msk [vmem:[#allocation2 + $0x8] sm:$0xff] %vm190, %v189
    // Predicated region
    $region30: #{tpu_custom_call.1} parent=1 // pred_check
      %p193 = pneg %p46
    $region31: #{tpu_custom_call.1} parent=1 // pred_check_branch
      %195 = sbr.rel (%p193) target = $region33
    $region32: #{tpu_custom_call.1} parent=1 // pred_region
      %v196 = vld [vmem:[#allocation2] sm:$0xff]
      %v197 = vld [vmem:[#allocation2 + $0x8] sm:$0xff]
      %198 = vst.msk [vmem:[#allocation8] sm:$0xff] %vm190, %v196
      %199 = vst.msk [vmem:[#allocation8 + $0x8] sm:$0xff] %vm190, %v197
    $region33: #{tpu_custom_call.1} parent=1 // pred_fallthru
      _
    // Predicated region
    $region34: #{tpu_custom_call.1} parent=1 // pred_check
      _
    $region35: #{tpu_custom_call.1} parent=1 // pred_check_branch
      %201 = sbr.rel (0) target = $region37
    $region36: #{tpu_custom_call.1} parent=1 // pred_region
      %s203 = ssub.s32 256, 256
      %204 = vsyncadd [#allocation5], %s203
      %s205 = sshll.u32 [#allocation8], 4
      %s206 = int_to_ptr.vmem [resolvable:$true] %s205
      %211 = dma.vmem_to_hbm [thread:$0]  %s206, 256, %s4, [#allocation5], 128, 128, 8
    $region37: #{tpu_custom_call.1} parent=1 // pred_fallthru
      _
    // Predicated region
    $region38: #{tpu_custom_call.1} parent=1 // pred_check
      _
    $region39: #{tpu_custom_call.1} parent=1 // pred_check_branch
      %213 = sbr.rel (0) target = $region41
    $region40: #{tpu_custom_call.1} parent=1 // pred_region
      %214 = dma.done [#allocation5], 256
    $region41: #{tpu_custom_call.1} parent=1 // pred_fallthru
      _
    %215 = vsyncpa [#allocation4], 1
    %216 = vsyncpa [#allocation7], 1
    %217 = vsyncpa [#allocation5], 1

</llo_original>
